<compile_context>
chip_gen: v7x
topology: tpu7x:2x2x1
jax: 0.10.0
libtpu: 0.0.40
codegen_flags: <defaults>
</compile_context>

<pallas_src>
import jax
import jax.numpy as jnp
from jax.experimental import pallas as pl
from jax.experimental.pallas import tpu as pltpu


def fnn_context_kernel(tac_ref, act_ref, w1t_ref, w1a_ref, b1_ref,
                       w2_ref, b2_ref, tgt_ref,
                       y_ref, abs_sum_ref):
    """One batch tile: fused concat-matmul + ReLU + matmul + |y-t| partial sum."""
    # fc1 on the concatenated input, without ever materializing the concat:
    # [tac | act] @ [[w1_tac], [w1_act]] == tac @ w1_tac + act @ w1_act
    h = jnp.dot(tac_ref[...], w1t_ref[...], preferred_element_type=jnp.float32)
    h = h + jnp.dot(act_ref[...], w1a_ref[...],
                    preferred_element_type=jnp.float32)
    h = jnp.maximum(h + b1_ref[...], 0.0)                              # relu(fc1)

    y = jnp.dot(h, w2_ref[...], preferred_element_type=jnp.float32)    # fc2
    y = y + b2_ref[...]
    y_ref[...] = y

    # Per-tile L1 partial sum (scaled to a mean in the wrapper).  Keeping the
    # reduction un-normalized here lets the batch grid stay "parallel".
    abs_sum_ref[0, 0] = jnp.sum(jnp.abs(y - tgt_ref[...]))


def _pick_batch_tile(batch, max_tile=512):
    """Largest tile (<= max_tile, multiple of 8) that divides the batch."""
    if batch <= max_tile:
        return batch, 1
    for t in (512, 256, 128, 64, 32, 16, 8):
        if batch % t == 0:
            return t, batch // t
    return batch, 1     # ragged batch: fall back to one whole-batch block


def fnn_context_forward(tactiles, actions, target, params):
    tactiles = tactiles.astype(jnp.float32)
    actions = actions.astype(jnp.float32)
    target = target.astype(jnp.float32)

    batch, tac_dim = tactiles.shape
    act_dim = actions.shape[1]
    hidden = params["w1_tac"].shape[1]
    out_size = params["w2"].shape[1]

    tile_b, n_tiles = _pick_batch_tile(batch)

    flops = 2 * batch * (tac_dim * hidden + act_dim * hidden + hidden * out_size)
    bytes_accessed = 4 * (
        batch * (tac_dim + act_dim)                      # activations in
        + tac_dim * hidden + act_dim * hidden + hidden   # fc1 params
        + hidden * out_size + out_size                   # fc2 params
        + 2 * batch * out_size                           # target in, y out
        + n_tiles                                        # partial sums out
    )

    y, partial_abs = pl.pallas_call(
        fnn_context_kernel,
        grid=(n_tiles,),
        in_specs=[
            pl.BlockSpec((tile_b, tac_dim), lambda i: (i, 0)),   # tactiles
            pl.BlockSpec((tile_b, act_dim), lambda i: (i, 0)),   # actions
            pl.BlockSpec((tac_dim, hidden), lambda i: (0, 0)),   # w1 (tactile rows)
            pl.BlockSpec((act_dim, hidden), lambda i: (0, 0)),   # w1 (action rows)
            pl.BlockSpec((1, hidden), lambda i: (0, 0)),         # b1
            pl.BlockSpec((hidden, out_size), lambda i: (0, 0)),  # w2
            pl.BlockSpec((1, out_size), lambda i: (0, 0)),       # b2
            pl.BlockSpec((tile_b, out_size), lambda i: (i, 0)),  # target
        ],
        out_specs=(
            pl.BlockSpec((tile_b, out_size), lambda i: (i, 0)),  # y
            pl.BlockSpec((1, 1), lambda i: (i, 0),               # |y-t| partial
                         memory_space=pltpu.MemorySpace.SMEM),
        ),
        out_shape=(
            jax.ShapeDtypeStruct((batch, out_size), jnp.float32),
            jax.ShapeDtypeStruct((n_tiles, 1), jnp.float32),
        ),
        compiler_params=pltpu.CompilerParams(
            dimension_semantics=("parallel",)),
        cost_estimate=pl.CostEstimate(
            flops=flops, transcendentals=0, bytes_accessed=bytes_accessed),
    )(tactiles, actions,
      params["w1_tac"], params["w1_act"], params["b1"],
      params["w2"], params["b2"], target)

    # Finish the mean with a single multiply by a precomputed constant.
    mae = jnp.sum(partial_abs) * (1.0 / float(batch * out_size))
    return mae, y


def init_params(key, tactile_dim, action_dim, hidden_size, output_size):
    """nn.Linear-style init U(-1/sqrt(fan_in), 1/sqrt(fan_in)); w1 pre-split."""
    tactile_size = tactile_dim + action_dim
    k1, k2, k3, k4 = jax.random.split(key, 4)
    lim1 = 1.0 / jnp.sqrt(tactile_size)
    lim2 = 1.0 / jnp.sqrt(hidden_size)
    w1_full = jax.random.uniform(k1, (tactile_size, hidden_size), jnp.float32,
                                 -lim1, lim1)
    return {
        "w1_tac": w1_full[:tactile_dim],          # rows multiplying tactiles
        "w1_act": w1_full[tactile_dim:],          # rows multiplying actions
        "b1": jax.random.uniform(k2, (1, hidden_size), jnp.float32, -lim1, lim1),
        "w2": jax.random.uniform(k3, (hidden_size, output_size), jnp.float32,
                                 -lim2, lim2),
        "b2": jax.random.uniform(k4, (1, output_size), jnp.float32, -lim2, lim2),
    }


if __name__ == "__main__":
    # Small shapes consistent with the module:
    #   tactile_size = tactile_dim + action_dim = 24 + 8 = 32
    #   hidden_size = 32, output_size = 16, batch = 8
    batch, tactile_dim, action_dim = 8, 24, 8
    hidden_size, output_size = 32, 16

    key = jax.random.PRNGKey(0)
    k_t, k_a, k_tgt, k_p = jax.random.split(key, 4)

    tactiles = jax.random.normal(k_t, (batch, tactile_dim), jnp.float32)
    actions = jax.random.normal(k_a, (batch, action_dim), jnp.float32)
    target = jax.random.normal(k_tgt, (batch, output_size), jnp.float32)
    params = init_params(k_p, tactile_dim, action_dim, hidden_size, output_size)

    mae, y = fnn_context_forward(tactiles, actions, target, params)
    jax.block_until_ready((mae, y))

    # Pure-JAX reference check (reconstruct the un-split w1 / the concat).
    w1_full = jnp.concatenate([params["w1_tac"], params["w1_act"]], axis=0)
    x_ref = jnp.concatenate([tactiles, actions], axis=1)
    h_ref = jnp.maximum(x_ref @ w1_full + params["b1"], 0.0)
    y_ref = h_ref @ params["w2"] + params["b2"]
    mae_ref = jnp.mean(jnp.abs(y_ref - target))
    assert jnp.allclose(y, y_ref, atol=1e-5), "prediction mismatch"
    assert jnp.allclose(mae, mae_ref, atol=1e-5), "mae mismatch"

    print("KERNEL_OK")
</pallas_src>

<mosaic_0001>
module attributes {stable_mosaic.version = 11 : i64} {
  func.func @fnn_context_kernel(%arg0: i32, %arg1: memref<8x24xf32, #tpu.memory_space<vmem>>, %arg2: memref<8x8xf32, #tpu.memory_space<vmem>>, %arg3: memref<24x32xf32, #tpu.memory_space<vmem>>, %arg4: memref<8x32xf32, #tpu.memory_space<vmem>>, %arg5: memref<1x32xf32, #tpu.memory_space<vmem>>, %arg6: memref<32x16xf32, #tpu.memory_space<vmem>>, %arg7: memref<1x16xf32, #tpu.memory_space<vmem>>, %arg8: memref<8x16xf32, #tpu.memory_space<vmem>>, %arg9: memref<8x16xf32, #tpu.memory_space<vmem>>, %arg10: memref<1x1xf32, #tpu.memory_space<smem>>) attributes {dimension_semantics = [#tpu.dimension_semantics<parallel>], iteration_bounds = array<i64: 1>, scalar_prefetch = 0 : i64, scratch_operands = 0 : i64, tpu.core_type = #tpu.core_type<tc>, window_params = [{transform_indices = @transform_0, window_bounds = array<i64: 8, 24>}, {transform_indices = @transform_1, window_bounds = array<i64: 8, 8>}, {pipeline_mode = #tpu.pipeline_mode<synchronous>, transform_indices = @transform_2, window_bounds = array<i64: 24, 32>}, {pipeline_mode = #tpu.pipeline_mode<synchronous>, transform_indices = @transform_3, window_bounds = array<i64: 8, 32>}, {pipeline_mode = #tpu.pipeline_mode<synchronous>, transform_indices = @transform_4, window_bounds = array<i64: 1, 32>}, {pipeline_mode = #tpu.pipeline_mode<synchronous>, transform_indices = @transform_5, window_bounds = array<i64: 32, 16>}, {pipeline_mode = #tpu.pipeline_mode<synchronous>, transform_indices = @transform_6, window_bounds = array<i64: 1, 16>}, {transform_indices = @transform_7, window_bounds = array<i64: 8, 16>}, {transform_indices = @transform_8, window_bounds = array<i64: 8, 16>}, {transform_indices = @transform_9, window_bounds = array<i64: 1, 1>}]} {
    %c0 = arith.constant 0 : index
    %c0_0 = arith.constant 0 : index
    %0 = vector.load %arg1[%c0, %c0_0] : memref<8x24xf32, #tpu.memory_space<vmem>>, vector<8x24xf32>
    %c0_1 = arith.constant 0 : index
    %c0_2 = arith.constant 0 : index
    %1 = vector.load %arg3[%c0_1, %c0_2] : memref<24x32xf32, #tpu.memory_space<vmem>>, vector<24x32xf32>
    %cst = arith.constant dense<0.000000e+00> : vector<8x32xf32>
    %2 = tpu.matmul %0, %1, %cst {dimension_numbers = #tpu.dot_dimension_numbers<[1], [0], [0], [1], [0, 0, 1, 1], [], []>} : vector<8x24xf32>, vector<24x32xf32>, vector<8x32xf32> -> vector<8x32xf32>
    %c0_3 = arith.constant 0 : index
    %c0_4 = arith.constant 0 : index
    %3 = vector.load %arg2[%c0_3, %c0_4] : memref<8x8xf32, #tpu.memory_space<vmem>>, vector<8x8xf32>
    %c0_5 = arith.constant 0 : index
    %c0_6 = arith.constant 0 : index
    %4 = vector.load %arg4[%c0_5, %c0_6] : memref<8x32xf32, #tpu.memory_space<vmem>>, vector<8x32xf32>
    %cst_7 = arith.constant dense<0.000000e+00> : vector<8x32xf32>
    %5 = tpu.matmul %3, %4, %cst_7 {dimension_numbers = #tpu.dot_dimension_numbers<[1], [0], [0], [1], [0, 0, 1, 1], [], []>} : vector<8x8xf32>, vector<8x32xf32>, vector<8x32xf32> -> vector<8x32xf32>
    %6 = arith.addf %2, %5 : vector<8x32xf32>
    %c0_8 = arith.constant 0 : index
    %c0_9 = arith.constant 0 : index
    %7 = vector.load %arg5[%c0_8, %c0_9] : memref<1x32xf32, #tpu.memory_space<vmem>>, vector<1x32xf32>
    %8 = vector.broadcast %7 : vector<1x32xf32> to vector<8x32xf32>
    %9 = arith.addf %6, %8 : vector<8x32xf32>
    %cst_10 = arith.constant 0.000000e+00 : f32
    %10 = vector.broadcast %cst_10 : f32 to vector<8x32xf32>
    %11 = arith.maximumf %9, %10 : vector<8x32xf32>
    %c0_11 = arith.constant 0 : index
    %c0_12 = arith.constant 0 : index
    %12 = vector.load %arg6[%c0_11, %c0_12] : memref<32x16xf32, #tpu.memory_space<vmem>>, vector<32x16xf32>
    %cst_13 = arith.constant dense<0.000000e+00> : vector<8x16xf32>
    %13 = tpu.matmul %11, %12, %cst_13 {dimension_numbers = #tpu.dot_dimension_numbers<[1], [0], [0], [1], [0, 0, 1, 1], [], []>} : vector<8x32xf32>, vector<32x16xf32>, vector<8x16xf32> -> vector<8x16xf32>
    %c0_14 = arith.constant 0 : index
    %c0_15 = arith.constant 0 : index
    %14 = vector.load %arg7[%c0_14, %c0_15] : memref<1x16xf32, #tpu.memory_space<vmem>>, vector<1x16xf32>
    %15 = vector.broadcast %14 : vector<1x16xf32> to vector<8x16xf32>
    %16 = arith.addf %13, %15 : vector<8x16xf32>
    %c0_16 = arith.constant 0 : index
    %c0_17 = arith.constant 0 : index
    %17 = vector.load %arg9[%c0_16, %c0_17] : memref<8x16xf32, #tpu.memory_space<vmem>>, vector<8x16xf32>
    tpu.vector_store %arg9[%c0_16, %c0_17], %16 {strides = array<i32>} : memref<8x16xf32, #tpu.memory_space<vmem>>, vector<8x16xf32>,
    %c0_18 = arith.constant 0 : index
    %c0_19 = arith.constant 0 : index
    %18 = vector.load %arg8[%c0_18, %c0_19] : memref<8x16xf32, #tpu.memory_space<vmem>>, vector<8x16xf32>
    %19 = arith.subf %16, %18 : vector<8x16xf32>
    %20 = math.absf %19 : vector<8x16xf32>
    %21 = vector.shape_cast %20 : vector<8x16xf32> to vector<1x8x16xf32>
    %cst_20 = arith.constant dense<0.000000e+00> : vector<1xf32>
    %22 = vector.multi_reduction <add>, %21, %cst_20 [1, 2] : vector<1x8x16xf32> to vector<1xf32>
    %23 = vector.shape_cast %22 : vector<1xf32> to vector<1x1x1xf32>
    %24 = vector.extract %23[0, 0, 0] : f32 from vector<1x1x1xf32>
    %c0_21 = arith.constant 0 : index
    %c0_22 = arith.constant 0 : index
    %25 = memref.load %arg10[%c0_21, %c0_22] : memref<1x1xf32, #tpu.memory_space<smem>>
    memref.store %24, %arg10[%c0_21, %c0_22] : memref<1x1xf32, #tpu.memory_space<smem>>
    return
  }
  func.func @transform_0(%arg0: i32) -> (i32, i32) {
    %c0_i32 = arith.constant 0 : i32
    %c0_i32_0 = arith.constant 0 : i32
    return %arg0, %c0_i32 : i32, i32
  }
  func.func @transform_1(%arg0: i32) -> (i32, i32) {
    %c0_i32 = arith.constant 0 : i32
    %c0_i32_0 = arith.constant 0 : i32
    return %arg0, %c0_i32 : i32, i32
  }
  func.func @transform_2(%arg0: i32) -> (i32, i32) {
    %c0_i32 = arith.constant 0 : i32
    %c0_i32_0 = arith.constant 0 : i32
    %c0_i32_1 = arith.constant 0 : i32
    return %c0_i32, %c0_i32_0 : i32, i32
  }
  func.func @transform_3(%arg0: i32) -> (i32, i32) {
    %c0_i32 = arith.constant 0 : i32
    %c0_i32_0 = arith.constant 0 : i32
    %c0_i32_1 = arith.constant 0 : i32
    return %c0_i32, %c0_i32_0 : i32, i32
  }
  func.func @transform_4(%arg0: i32) -> (i32, i32) {
    %c0_i32 = arith.constant 0 : i32
    %c0_i32_0 = arith.constant 0 : i32
    %c0_i32_1 = arith.constant 0 : i32
    return %c0_i32, %c0_i32_0 : i32, i32
  }
  func.func @transform_5(%arg0: i32) -> (i32, i32) {
    %c0_i32 = arith.constant 0 : i32
    %c0_i32_0 = arith.constant 0 : i32
    %c0_i32_1 = arith.constant 0 : i32
    return %c0_i32, %c0_i32_0 : i32, i32
  }
  func.func @transform_6(%arg0: i32) -> (i32, i32) {
    %c0_i32 = arith.constant 0 : i32
    %c0_i32_0 = arith.constant 0 : i32
    %c0_i32_1 = arith.constant 0 : i32
    return %c0_i32, %c0_i32_0 : i32, i32
  }
  func.func @transform_7(%arg0: i32) -> (i32, i32) {
    %c0_i32 = arith.constant 0 : i32
    %c0_i32_0 = arith.constant 0 : i32
    return %arg0, %c0_i32 : i32, i32
  }
  func.func @transform_8(%arg0: i32) -> (i32, i32) {
    %c0_i32 = arith.constant 0 : i32
    %c0_i32_0 = arith.constant 0 : i32
    return %arg0, %c0_i32 : i32, i32
  }
  func.func @transform_9(%arg0: i32) -> (i32, i32) {
    %c0_i32 = arith.constant 0 : i32
    %c0_i32_0 = arith.constant 0 : i32
    return %arg0, %c0_i32 : i32, i32
  }
}

</mosaic_0001>

<llo_original>
// kernel: tpu_custom_call.1
$region0: #{tpu_custom_call.1}
  #allocation0 [shape = 'u32[]', space=smem, size = 0x4, offset = 0x4, fixed_abs, tag = 'smem constant byte address 0x4 - core index']
  #allocation1 [shape = 'u32[144,128]{1,0:T(1,128)}', space=vmem, size = 0x12000, scoped, tag = 'internal scratch']
  %s0 = inlined_call_operand.vmem [shape: f32[8,24], index: 0, kind: input, shape index: {}]
  %s1 = inlined_call_operand.vmem [shape: f32[8,8], index: 1, kind: input, shape index: {}]
  %s2 = inlined_call_operand.vmem [shape: f32[24,32], index: 2, kind: input, shape index: {}]
  %s3 = inlined_call_operand.vmem [shape: f32[8,32], index: 3, kind: input, shape index: {}]
  %s4 = inlined_call_operand.vmem [shape: f32[1,32], index: 4, kind: input, shape index: {}]
  %s5 = inlined_call_operand.vmem [shape: f32[32,16], index: 5, kind: input, shape index: {}]
  %s6 = inlined_call_operand.vmem [shape: f32[1,16], index: 6, kind: input, shape index: {}]
  %s7 = inlined_call_operand.vmem [shape: f32[8,16], index: 7, kind: input, shape index: {}]
  %s8 = inlined_call_operand.hbm [shape: f32[8,16], index: 8, kind: output, shape index: {0}]
  %s9 = inlined_call_operand.hbm [shape: f32[1,1], index: 9, kind: output, shape index: {1}]
  %10 = xla_tuple %s8, %s9
  %s11 = sld [smem:[#allocation0]]
  $region50: #{tpu_custom_call.1} parent=0
    _
  %s13 = ssub.s32 1, %s11
  %s14 = scalar_select 0, %s13, %s11
  $region1: #{tpu_custom_call.1} parent=0
    #allocation2 [shape = 'u8[4096]{0}', space=vmem, size = 0x1000, scoped, tag = 'output window, operand 0, single buffered']
    #allocation3 [shape = 's32[1]{0}', space=sflag, size = 0x4, scoped, tag = 'scoped memory for tpu_custom_call.1']
    #allocation4 [shape = 's32[1]{0}', space=sflag, size = 0x4, scoped, tag = 'scoped memory for tpu_custom_call.1']
    #allocation5 [shape = 'u8[512]{0}', space=smem, size = 0x200, scoped, tag = 'output window, operand 1, single buffered']
    %15 = vsyncpa [#allocation3], 0
    %16 = vsyncpa [#allocation4], 0
    // Predicated region
    $region2: #{tpu_custom_call.1} parent=1 // pred_check
      _
    $region3: #{tpu_custom_call.1} parent=1 // pred_check_branch
      %18 = sbr.rel (0) target = $region5
    $region4: #{tpu_custom_call.1} parent=1 // pred_region
      _
    $region5: #{tpu_custom_call.1} parent=1 // pred_fallthru
      _
    // Predicated region
    $region6: #{tpu_custom_call.1} parent=1 // pred_check
      _
    $region7: #{tpu_custom_call.1} parent=1 // pred_check_branch
      %20 = sbr.rel (0) target = $region9
    $region8: #{tpu_custom_call.1} parent=1 // pred_region
      _
    $region9: #{tpu_custom_call.1} parent=1 // pred_fallthru
      _
    // Predicated region
    $region10: #{tpu_custom_call.1} parent=1 // pred_check
      _
    $region11: #{tpu_custom_call.1} parent=1 // pred_check_branch
      %22 = sbr.rel (0) target = $region13
    $region12: #{tpu_custom_call.1} parent=1 // pred_region
      _
    $region13: #{tpu_custom_call.1} parent=1 // pred_fallthru
      _
    // Predicated region
    $region14: #{tpu_custom_call.1} parent=1 // pred_check
      _
    $region15: #{tpu_custom_call.1} parent=1 // pred_check_branch
      %24 = sbr.rel (0) target = $region17
    $region16: #{tpu_custom_call.1} parent=1 // pred_region
      _
    $region17: #{tpu_custom_call.1} parent=1 // pred_fallthru
      _
    // Predicated region
    $region18: #{tpu_custom_call.1} parent=1 // pred_check
      _
    $region19: #{tpu_custom_call.1} parent=1 // pred_check_branch
      %26 = sbr.rel (0) target = $region21
    $region20: #{tpu_custom_call.1} parent=1 // pred_region
      _
    $region21: #{tpu_custom_call.1} parent=1 // pred_fallthru
      _
    // Predicated region
    $region22: #{tpu_custom_call.1} parent=1 // pred_check
      _
    $region23: #{tpu_custom_call.1} parent=1 // pred_check_branch
      %28 = sbr.rel (0) target = $region25
    $region24: #{tpu_custom_call.1} parent=1 // pred_region
      _
    $region25: #{tpu_custom_call.1} parent=1 // pred_fallthru
      _
    // Predicated region
    $region26: #{tpu_custom_call.1} parent=1 // pred_check
      _
    $region27: #{tpu_custom_call.1} parent=1 // pred_check_branch
      %30 = sbr.rel (0) target = $region29
    $region28: #{tpu_custom_call.1} parent=1 // pred_region
      _
    $region29: #{tpu_custom_call.1} parent=1 // pred_fallthru
      _
    // Predicated region
    $region30: #{tpu_custom_call.1} parent=1 // pred_check
      _
    $region31: #{tpu_custom_call.1} parent=1 // pred_check_branch
      %32 = sbr.rel (0) target = $region33
    $region32: #{tpu_custom_call.1} parent=1 // pred_region
      _
    $region33: #{tpu_custom_call.1} parent=1 // pred_fallthru
      _
    %v33 = vld [vmem:[%s0] sm:$0xff]
    %v34 = vld [vmem:[%s2] sm:$0xff]
    %v35 = vld [vmem:[%s2 + $0x8] sm:$0xff]
    %v36 = vld [vmem:[%s2 + $0x10] sm:$0xff]
    %v37 = vld [vmem:[%s1] sm:$0xff]
    %v38 = vld [vmem:[%s3] sm:$0xff]
    %vm39 = vcmask 64512
    %v41 = vsel %vm39, %v37, 0
    %43 = vmatprep.subr.mxu0 0.0
    %44 = vmatpush1.msra.mxu0 %v38
    %45 = vmatprep.subr.mxu0 0.0
    %46 = vmatpush1.msra.mxu0 0.0
    %47 = vmatprep.subr.mxu0 0.0
    %48 = vmatpush1.msra.mxu0 0.0
    %49 = vmatprep.subr.mxu0 0.0
    %50 = vmatpush1.msra.mxu0 0.0
    %51 = vmatprep.subr.mxu0 0.0
    %52 = vmatpush1.msra.mxu0 0.0
    %53 = vmatprep.subr.mxu0 0.0
    %54 = vmatpush1.msra.mxu0 0.0
    %55 = vmatprep.subr.mxu0 0.0
    %56 = vmatpush1.msra.mxu0 0.0
    %57 = vmatprep.subr.mxu0 0.0
    %58 = vmatpush1.msra.mxu0 0.0
    %59 = vmatprep.subr.mxu0 0.0
    %60 = vmatpush1.msra.mxu0 0.0
    %61 = vmatprep.subr.mxu0 0.0
    %62 = vmatpush1.msra.mxu0 0.0
    %63 = vmatprep.subr.mxu0 0.0
    %64 = vmatpush1.msra.mxu0 0.0
    %65 = vmatprep.subr.mxu0 0.0
    %66 = vmatpush1.msra.mxu0 0.0
    %67 = vmatprep.subr.mxu0 0.0
    %68 = vmatpush1.msra.mxu0 0.0
    %69 = vmatprep.subr.mxu0 0.0
    %70 = vmatpush1.msra.mxu0 0.0
    %71 = vmatprep.subr.mxu0 0.0
    %72 = vmatpush1.msra.mxu0 0.0
    %73 = vmatprep.subr.mxu0 0.0
    %74 = vmatpush1.msra.mxu0 0.0
    %75 = vmatprep.subr.mxu0 0.0
    %76 = vmatpush1.msra.mxu0 0.0
    %77 = vmatprep.subr.mxu0 0.0
    %78 = vmatpush1.msra.mxu0 0.0
    %79 = vmatprep.subr.mxu0 0.0
    %80 = vmatpush1.msra.mxu0 0.0
    %81 = vmatprep.subr.mxu0 0.0
    %82 = vmatpush1.msra.mxu0 0.0
    %83 = vmatprep.subr.mxu0 0.0
    %84 = vmatpush1.msra.mxu0 0.0
    %85 = vmatprep.subr.mxu0 0.0
    %86 = vmatpush1.msra.mxu0 0.0
    %87 = vmatprep.subr.mxu0 0.0
    %88 = vmatpush1.msra.mxu0 0.0
    %89 = vmatprep.subr.mxu0 0.0
    %90 = vmatpush1.msra.mxu0 0.0
    %91 = vmatprep.subr.mxu0 0.0
    %92 = vmatpush1.msra.mxu0 0.0
    %93 = vmatprep.subr.mxu0 0.0
    %94 = vmatpush1.msra.mxu0 0.0
    %95 = vmatprep.subr.mxu0 0.0
    %96 = vmatpush1.msra.mxu0 0.0
    %97 = vmatprep.subr.mxu0 0.0
    %98 = vmatpush1.msra.mxu0 0.0
    %99 = vmatprep.subr.mxu0 0.0
    %100 = vmatpush1.msra.mxu0 0.0
    %101 = vmatprep.subr.mxu0 0.0
    %102 = vmatpush1.msra.mxu0 0.0
    %103 = vmatprep.subr.mxu0 0.0
    %104 = vmatpush1.msra.mxu0 0.0
    %105 = vmatprep.subr.mxu0 0.0
    %106 = vmatpush1.msra.mxu0 0.0
    %107 = vmatprep.mubr.f32.mxu0 0.0
    %108 = vmatmul.mubr.f32.gmra.mrb[0].mxu0 %v41
    %v109 = vpop.f32.mrb[0].mxu0
    %v110 = vadd.f32 0.0, %v109
    %v111 = vpop.f32.mrb[0].mxu0
    %112 = vdwg.mxu0
    %vm113 = vcmask 195584
    %v115 = vsel %vm113, %v33, 0
    %117 = vmatprep.subr.mxu0 0.0
    %118 = vmatpush1.msra.mxu0 %v34
    %119 = vmatprep.subr.mxu0 0.0
    %120 = vmatpush1.msra.mxu0 %v35
    %121 = vmatprep.subr.mxu0 0.0
    %122 = vmatpush1.msra.mxu0 %v36
    %123 = vmatprep.subr.mxu0 0.0
    %124 = vmatpush1.msra.mxu0 0.0
    %125 = vmatprep.subr.mxu0 0.0
    %126 = vmatpush1.msra.mxu0 0.0
    %127 = vmatprep.subr.mxu0 0.0
    %128 = vmatpush1.msra.mxu0 0.0
    %129 = vmatprep.subr.mxu0 0.0
    %130 = vmatpush1.msra.mxu0 0.0
    %131 = vmatprep.subr.mxu0 0.0
    %132 = vmatpush1.msra.mxu0 0.0
    %133 = vmatprep.subr.mxu0 0.0
    %134 = vmatpush1.msra.mxu0 0.0
    %135 = vmatprep.subr.mxu0 0.0
    %136 = vmatpush1.msra.mxu0 0.0
    %137 = vmatprep.subr.mxu0 0.0
    %138 = vmatpush1.msra.mxu0 0.0
    %139 = vmatprep.subr.mxu0 0.0
    %140 = vmatpush1.msra.mxu0 0.0
    %141 = vmatprep.subr.mxu0 0.0
    %142 = vmatpush1.msra.mxu0 0.0
    %143 = vmatprep.subr.mxu0 0.0
    %144 = vmatpush1.msra.mxu0 0.0
    %145 = vmatprep.subr.mxu0 0.0
    %146 = vmatpush1.msra.mxu0 0.0
    %147 = vmatprep.subr.mxu0 0.0
    %148 = vmatpush1.msra.mxu0 0.0
    %149 = vmatprep.subr.mxu0 0.0
    %150 = vmatpush1.msra.mxu0 0.0
    %151 = vmatprep.subr.mxu0 0.0
    %152 = vmatpush1.msra.mxu0 0.0
    %153 = vmatprep.subr.mxu0 0.0
    %154 = vmatpush1.msra.mxu0 0.0
    %155 = vmatprep.subr.mxu0 0.0
    %156 = vmatpush1.msra.mxu0 0.0
    %157 = vmatprep.subr.mxu0 0.0
    %158 = vmatpush1.msra.mxu0 0.0
    %159 = vmatprep.subr.mxu0 0.0
    %160 = vmatpush1.msra.mxu0 0.0
    %161 = vmatprep.subr.mxu0 0.0
    %162 = vmatpush1.msra.mxu0 0.0
    %163 = vmatprep.subr.mxu0 0.0
    %164 = vmatpush1.msra.mxu0 0.0
    %165 = vmatprep.subr.mxu0 0.0
    %166 = vmatpush1.msra.mxu0 0.0
    %167 = vmatprep.subr.mxu0 0.0
    %168 = vmatpush1.msra.mxu0 0.0
    %169 = vmatprep.subr.mxu0 0.0
    %170 = vmatpush1.msra.mxu0 0.0
    %171 = vmatprep.subr.mxu0 0.0
    %172 = vmatpush1.msra.mxu0 0.0
    %173 = vmatprep.subr.mxu0 0.0
    %174 = vmatpush1.msra.mxu0 0.0
    %175 = vmatprep.subr.mxu0 0.0
    %176 = vmatpush1.msra.mxu0 0.0
    %177 = vmatprep.subr.mxu0 0.0
    %178 = vmatpush1.msra.mxu0 0.0
    %179 = vmatprep.subr.mxu0 0.0
    %180 = vmatpush1.msra.mxu0 0.0
    %181 = vmatprep.mubr.f32.mxu0 0.0
    %182 = vmatmul.mubr.f32.gmra.mrb[0].mxu0 %v115
    %v183 = vpop.f32.mrb[0].mxu0
    %v184 = vadd.f32 %v110, %v183
    %v185 = vpop.f32.mrb[0].mxu0
    %186 = vdwg.mxu0
    %v187 = vld [vmem:[%s4] sm:$0x1]
    %v189 = vlaneseq
    %v190 = vshrl.u32 %v189, 7
    %v191 = vsub.s32 0, %v190
    %v192 = vrot.slane %v187, %v191
    %v194 = vadd.f32 %v184, %v192
    %v195 = vmax.f32 %v194, 0.0
    %v196 = vld [vmem:[%s5] sm:$0xff]
    %v197 = vld [vmem:[%s5 + $0x8] sm:$0xff]
    %v198 = vld [vmem:[%s5 + $0x10] sm:$0xff]
    %v199 = vld [vmem:[%s5 + $0x18] sm:$0xff]
    %v200 = vld [vmem:[%s6] sm:$0x1]
    %v202 = vlaneseq
    %v203 = vshrl.u32 %v202, 7
    %v204 = vsub.s32 0, %v203
    %v205 = vrot.slane %v200, %v204
    %vm207 = vcmask 261120
    %v209 = vsel %vm207, %v195, 0
    %211 = vmatprep.subr.mxu0 0.0
    %212 = vmatpush1.msra.mxu0 %v196
    %213 = vmatprep.subr.mxu0 0.0
    %214 = vmatpush1.msra.mxu0 %v197
    %215 = vmatprep.subr.mxu0 0.0
    %216 = vmatpush1.msra.mxu0 %v198
    %217 = vmatprep.subr.mxu0 0.0
    %218 = vmatpush1.msra.mxu0 %v199
    %219 = vmatprep.subr.mxu0 0.0
    %220 = vmatpush1.msra.mxu0 0.0
    %221 = vmatprep.subr.mxu0 0.0
    %222 = vmatpush1.msra.mxu0 0.0
    %223 = vmatprep.subr.mxu0 0.0
    %224 = vmatpush1.msra.mxu0 0.0
    %225 = vmatprep.subr.mxu0 0.0
    %226 = vmatpush1.msra.mxu0 0.0
    %227 = vmatprep.subr.mxu0 0.0
    %228 = vmatpush1.msra.mxu0 0.0
    %229 = vmatprep.subr.mxu0 0.0
    %230 = vmatpush1.msra.mxu0 0.0
    %231 = vmatprep.subr.mxu0 0.0
    %232 = vmatpush1.msra.mxu0 0.0
    %233 = vmatprep.subr.mxu0 0.0
    %234 = vmatpush1.msra.mxu0 0.0
    %235 = vmatprep.subr.mxu0 0.0
    %236 = vmatpush1.msra.mxu0 0.0
    %237 = vmatprep.subr.mxu0 0.0
    %238 = vmatpush1.msra.mxu0 0.0
    %239 = vmatprep.subr.mxu0 0.0
    %240 = vmatpush1.msra.mxu0 0.0
    %241 = vmatprep.subr.mxu0 0.0
    %242 = vmatpush1.msra.mxu0 0.0
    %243 = vmatprep.subr.mxu0 0.0
    %244 = vmatpush1.msra.mxu0 0.0
    %245 = vmatprep.subr.mxu0 0.0
    %246 = vmatpush1.msra.mxu0 0.0
    %247 = vmatprep.subr.mxu0 0.0
    %248 = vmatpush1.msra.mxu0 0.0
    %249 = vmatprep.subr.mxu0 0.0
    %250 = vmatpush1.msra.mxu0 0.0
    %251 = vmatprep.subr.mxu0 0.0
    %252 = vmatpush1.msra.mxu0 0.0
    %253 = vmatprep.subr.mxu0 0.0
    %254 = vmatpush1.msra.mxu0 0.0
    %255 = vmatprep.subr.mxu0 0.0
    %256 = vmatpush1.msra.mxu0 0.0
    %257 = vmatprep.subr.mxu0 0.0
    %258 = vmatpush1.msra.mxu0 0.0
    %259 = vmatprep.subr.mxu0 0.0
    %260 = vmatpush1.msra.mxu0 0.0
    %261 = vmatprep.subr.mxu0 0.0
    %262 = vmatpush1.msra.mxu0 0.0
    %263 = vmatprep.subr.mxu0 0.0
    %264 = vmatpush1.msra.mxu0 0.0
    %265 = vmatprep.subr.mxu0 0.0
    %266 = vmatpush1.msra.mxu0 0.0
    %267 = vmatprep.subr.mxu0 0.0
    %268 = vmatpush1.msra.mxu0 0.0
    %269 = vmatprep.subr.mxu0 0.0
    %270 = vmatpush1.msra.mxu0 0.0
    %271 = vmatprep.subr.mxu0 0.0
    %272 = vmatpush1.msra.mxu0 0.0
    %273 = vmatprep.subr.mxu0 0.0
    %274 = vmatpush1.msra.mxu0 0.0
    %275 = vmatprep.mubr.f32.mxu0 0.0
    %276 = vmatmul.mubr.f32.gmra.mrb[0].mxu0 %v209
    %v277 = vpop.f32.mrb[0].mxu0
    %v278 = vadd.f32 %v205, %v277
    %v279 = vpop.f32.mrb[0].mxu0
    %280 = vdwg.mxu0
    %vm281 = vcmask 130048
    %282 = vst.msk [vmem:[#allocation2] sm:$0xff] %vm281, %v278
    %v283 = vld [vmem:[%s7] sm:$0xff]
    %v284 = vsub.f32 %v278, %v283
    %v285 = vand.u32 2147483647, %v284
    %v286 = vsel %vm281, %v285, 0.0
    %287 = vadd.xlane.f32.xlu0 %v286
    %v288 = vpop.xlane.xlu0 %287
    %v289 = vrot.slane %v288, 4
    %v290 = vadd.f32 %v288, %v289
    %v291 = vrot.slane %v290, 2
    %v292 = vadd.f32 %v290, %v291
    %v293 = vrot.slane %v292, 1
    %v294 = vadd.f32 %v292, %v293
    %s295 = vtos %v294
    %s296 = scalar_lea.smem [#allocation5], 0
    %297 = sst [smem:[%s296]] %s295
    // Predicated region
    $region34: #{tpu_custom_call.1} parent=1 // pred_check
      _
    $region35: #{tpu_custom_call.1} parent=1 // pred_check_branch
      %299 = sbr.rel (0) target = $region37
    $region36: #{tpu_custom_call.1} parent=1 // pred_region
      %s301 = ssub.s32 128, 128
      %302 = vsyncadd [#allocation3], %s301
      %s304 = sshll.u32 [#allocation2], 4
      %s305 = int_to_ptr.vmem [resolvable:$true] %s304
      %307 = dma.vmem_to_hbm [thread:$0]  %s305, 128, %s8, [#allocation3]
    $region37: #{tpu_custom_call.1} parent=1 // pred_fallthru
      _
    // Predicated region
    $region38: #{tpu_custom_call.1} parent=1 // pred_check
      _
    $region39: #{tpu_custom_call.1} parent=1 // pred_check_branch
      %309 = sbr.rel (0) target = $region41
    $region40: #{tpu_custom_call.1} parent=1 // pred_region
      %s311 = ssub.s32 16, 16
      %312 = vsyncadd [#allocation4], %s311
      %315 = dma.smem_to_hbm [#allocation5], 16, %s9, [#allocation4]
    $region41: #{tpu_custom_call.1} parent=1 // pred_fallthru
      _
    // Predicated region
    $region42: #{tpu_custom_call.1} parent=1 // pred_check
      _
    $region43: #{tpu_custom_call.1} parent=1 // pred_check_branch
      %317 = sbr.rel (0) target = $region45
    $region44: #{tpu_custom_call.1} parent=1 // pred_region
      %318 = dma.done [#allocation3], 128
    $region45: #{tpu_custom_call.1} parent=1 // pred_fallthru
      _
    // Predicated region
    $region46: #{tpu_custom_call.1} parent=1 // pred_check
      _
    $region47: #{tpu_custom_call.1} parent=1 // pred_check_branch
      %320 = sbr.rel (0) target = $region49
    $region48: #{tpu_custom_call.1} parent=1 // pred_region
      %321 = dma.done [#allocation4], 16
    $region49: #{tpu_custom_call.1} parent=1 // pred_fallthru
      _
    %322 = sfence
    %323 = vsyncpa [#allocation3], 1
    %324 = vsyncpa [#allocation4], 1

</llo_original>
